<compile_context>
chip_gen: v5e
topology: v5e:2x2
jax: 0.10.0
libtpu: 0.0.40
codegen_flags: <defaults>
</compile_context>

<pallas_src>
import functools

import jax
import jax.numpy as jnp
from jax.experimental import pallas as pl
from jax.experimental.pallas import tpu as pltpu

SLAB = 8  # batch rows per LSTM grid step (one f32 sublane tile)


def round_up(x, m):
    return (x + m - 1) // m * m


# ----------------------------------------------------------------------------
# CNN stem kernel: tiled patch-matmul + bias + ReLU + running-sum pool
# ----------------------------------------------------------------------------
def cnn_kernel(a_ref, w_ref, b_ref, o_ref, acc_ref, *, hw, n_pad):
    c = pl.program_id(1)

    @pl.when(c == 0)
    def _():
        acc_ref[...] = jnp.zeros_like(acc_ref)

    # (chunk, K) bf16 @ (K, F) bf16 -> f32   (K = C*9, not padded to 128)
    pre = jnp.dot(a_ref[0], w_ref[...], preferred_element_type=jnp.float32)
    act = jnp.maximum(pre + b_ref[...], 0.0)
    acc_ref[...] += jnp.sum(act, axis=0, keepdims=True)

    @pl.when(c == pl.num_programs(1) - 1)
    def _():
        total = acc_ref[...]
        if n_pad:
            # Zero-padded patch rows contributed exactly ReLU(bias) each.
            total = total - float(n_pad) * jnp.maximum(b_ref[...], 0.0)
        o_ref[0] = total * (1.0 / hw)  # global average pool


def _pick_hw_chunk(hw):
    hw8 = round_up(hw, 8)
    if hw8 <= 2048:
        return hw8          # single chunk -> no per-step overhead on HW axis
    return 2048


def cnn_forward(patches, w_mat, bias_row, n_frames, hw, chunk):
    hw_pad, k_pad = patches.shape[1], patches.shape[2]
    feat = w_mat.shape[1]
    n_chunks = hw_pad // chunk
    kernel = functools.partial(cnn_kernel, hw=hw, n_pad=hw_pad - hw)
    out = pl.pallas_call(
        kernel,
        out_shape=jax.ShapeDtypeStruct((n_frames, 1, feat), jnp.float32),
        grid_spec=pltpu.PrefetchScalarGridSpec(
            num_scalar_prefetch=0,
            grid=(n_frames, n_chunks),
            in_specs=[
                pl.BlockSpec((1, chunk, k_pad), lambda n, c: (n, c, 0)),
                pl.BlockSpec((k_pad, feat), lambda n, c: (0, 0),
                             pipeline_mode=pl.Buffered(1)),
                pl.BlockSpec((1, feat), lambda n, c: (0, 0),
                             pipeline_mode=pl.Buffered(1)),
            ],
            out_specs=pl.BlockSpec((1, 1, feat), lambda n, c: (n, 0, 0)),
            scratch_shapes=[pltpu.VMEM((1, feat), jnp.float32)],
        ),
        compiler_params=pltpu.CompilerParams(
            dimension_semantics=("parallel", "arbitrary"),
            vmem_limit_bytes=32 * 1024 * 1024,
        ),
    )(patches, w_mat, bias_row)
    return out.reshape(n_frames, feat)


# ----------------------------------------------------------------------------
# Fused LSTM (in-kernel time loop) + FC head kernel, gridded over batch slabs
# ----------------------------------------------------------------------------
def make_lstm_fc_kernel(num_layers, seq_len, hp):
    def kernel(*refs):
        feats_ref = refs[0]                       # (1, S*SLAB, F) bf16
        wih0_ref, b0_ref, whh0_ref = refs[1], refs[2], refs[3]
        layer_refs = []
        idx = 4
        for _ in range(num_layers - 1):
            layer_refs.append((refs[idx], refs[idx + 1], refs[idx + 2]))
            idx += 3
        w1_ref, b1_ref, w2_ref, b2_ref = refs[idx:idx + 4]
        out_ref = refs[idx + 4]                   # (SLAB, OUTP) f32
        zin_scr = refs[idx + 5]                   # (S*SLAB, 4*HP) bf16

        # Hoisted layer-0 input projection: one bf16 MXU matmul for all
        # timesteps of this batch slab (stored bf16: half the scratch + vst).
        zin = jnp.dot(feats_ref[0], wih0_ref[...],
                      preferred_element_type=jnp.float32)
        zin_scr[...] = (zin + b0_ref[...]).astype(zin_scr.dtype)

        def gates(z, c_prev):
            i = jax.nn.sigmoid(z[:, 0 * hp:1 * hp])
            f = jax.nn.sigmoid(z[:, 1 * hp:2 * hp])
            g = jnp.tanh(z[:, 2 * hp:3 * hp])
            o = jax.nn.sigmoid(z[:, 3 * hp:4 * hp])
            c_new = f * c_prev + i * g
            h_new = o * jnp.tanh(c_new)
            return h_new, c_new

        def step(t, carry):
            hs, cs = carry
            row = pl.multiple_of(t * SLAB, SLAB)
            z0 = (zin_scr[pl.ds(row, SLAB), :].astype(jnp.float32)
                  + jnp.dot(hs[0].astype(jnp.bfloat16), whh0_ref[...],
                            preferred_element_type=jnp.float32))
            h_new, c_new = gates(z0, cs[0])
            new_hs, new_cs = [h_new], [c_new]
            x = h_new
            for l in range(1, num_layers):
                wih_ref, whh_ref, b_ref = layer_refs[l - 1]
                z = (jnp.dot(x.astype(jnp.bfloat16), wih_ref[...],
                             preferred_element_type=jnp.float32)
                     + jnp.dot(hs[l].astype(jnp.bfloat16), whh_ref[...],
                               preferred_element_type=jnp.float32)
                     + b_ref[...])
                h_new, c_new = gates(z, cs[l])
                new_hs.append(h_new)
                new_cs.append(c_new)
                x = h_new
            # TODO(synk): eval-mode only (no inter-layer dropout).
            return tuple(new_hs), tuple(new_cs)

        zeros = tuple(jnp.zeros((SLAB, hp), jnp.float32)
                      for _ in range(num_layers))
        unroll = seq_len if seq_len <= 8 else 4
        hs, _ = jax.lax.fori_loop(0, seq_len, step, (zeros, zeros),
                                  unroll=unroll)

        # Fused FC head: Linear -> ReLU -> Linear on the final hidden state.
        h_last = hs[num_layers - 1].astype(jnp.bfloat16)
        hfc = jnp.maximum(
            jnp.dot(h_last, w1_ref[...], preferred_element_type=jnp.float32)
            + b1_ref[...], 0.0)
        out_ref[...] = (jnp.dot(hfc.astype(jnp.bfloat16), w2_ref[...],
                                preferred_element_type=jnp.float32)
                        + b2_ref[...])

    return kernel


def _const_spec(shape):
    nd = len(shape)
    return pl.BlockSpec(shape, lambda i, nd=nd: (0,) * nd,
                        pipeline_mode=pl.Buffered(1))


def lstm_fc_forward(feats_tm, packed, seq_len, nb, hp, outp, num_layers):
    feat = feats_tm.shape[-1]
    args = [feats_tm] + list(packed)
    in_specs = [pl.BlockSpec((1, seq_len * SLAB, feat), lambda i: (i, 0, 0))]
    in_specs += [_const_spec(a.shape) for a in packed]
    return pl.pallas_call(
        make_lstm_fc_kernel(num_layers, seq_len, hp),
        out_shape=jax.ShapeDtypeStruct((nb * SLAB, outp), jnp.float32),
        grid_spec=pltpu.PrefetchScalarGridSpec(
            num_scalar_prefetch=0,
            grid=(nb,),
            in_specs=in_specs,
            out_specs=pl.BlockSpec((SLAB, outp), lambda i: (i, 0)),
            scratch_shapes=[pltpu.VMEM((seq_len * SLAB, 4 * hp),
                                       jnp.bfloat16)],
        ),
        compiler_params=pltpu.CompilerParams(
            dimension_semantics=("parallel",),
            vmem_limit_bytes=32 * 1024 * 1024,
        ),
    )(*args)


# ----------------------------------------------------------------------------
# Parameter packing (padding is exact: zero weights / zero bias)
# ----------------------------------------------------------------------------
def _pad_rows(w, rows):
    return jnp.pad(w, ((0, rows - w.shape[0]), (0, 0)))


def _pad_gates(w, hidden, hp):
    parts = []
    for k in range(4):
        g = w[:, k * hidden:(k + 1) * hidden]
        parts.append(jnp.pad(g, ((0, 0), (0, hp - hidden))))
    return jnp.concatenate(parts, axis=1)


def pack_lstm_fc_params(lstm_params, fc_w1, fc_b1, fc_w2, fc_b2,
                        hidden, hp, outp):
    w_ih0, w_hh0, b0 = lstm_params[0]
    packed = [
        _pad_gates(w_ih0, hidden, hp).astype(jnp.bfloat16),      # (F, 4HP)
        _pad_gates(b0, hidden, hp).astype(jnp.float32),          # (1, 4HP)
        _pad_gates(_pad_rows(w_hh0, hp), hidden, hp).astype(jnp.bfloat16),
    ]
    for (w_ih, w_hh, b) in lstm_params[1:]:
        packed.append(
            _pad_gates(_pad_rows(w_ih, hp), hidden, hp).astype(jnp.bfloat16))
        packed.append(
            _pad_gates(_pad_rows(w_hh, hp), hidden, hp).astype(jnp.bfloat16))
        packed.append(_pad_gates(b, hidden, hp).astype(jnp.float32))
    packed.append(jnp.pad(fc_w1, ((0, hp - hidden),
                                  (0, hp - hidden))).astype(jnp.bfloat16))
    packed.append(jnp.pad(fc_b1, ((0, 0),
                                  (0, hp - hidden))).astype(jnp.float32))
    packed.append(jnp.pad(fc_w2, ((0, hp - hidden),
                                  (0, outp - fc_w2.shape[1])
                                  )).astype(jnp.bfloat16))
    packed.append(jnp.pad(fc_b2, ((0, 0),
                                  (0, outp - fc_b2.shape[1])
                                  )).astype(jnp.float32))
    return packed


# ----------------------------------------------------------------------------
# Glue (plain JAX): im2col, layout/padding, full forward
# ----------------------------------------------------------------------------
def im2col_3x3(frames):
    # frames: (N, C, H, W) -> (N, H*W, C*9), same-padding 3x3 patches,
    # flattened (c, kh, kw) to match conv_w.reshape(F, C*9).
    n, c, h, w = frames.shape
    padded = jnp.pad(frames, ((0, 0), (0, 0), (1, 1), (1, 1)))
    cols = []
    for kh in range(3):
        for kw in range(3):
            cols.append(padded[:, :, kh:kh + h, kw:kw + w])
    patches = jnp.stack(cols, axis=2)                    # (N, C, 9, H, W)
    patches = jnp.transpose(patches, (0, 3, 4, 1, 2))    # (N, H, W, C, 9)
    return patches.reshape(n, h * w, c * 9)


def model_forward(x, conv_w, conv_b, lstm_params, fc_w1, fc_b1, fc_w2, fc_b2,
                  hidden, num_layers):
    b, s, c, h, w = x.shape
    n = b * s
    hw = h * w
    feat = conv_w.shape[0]
    k_raw = c * 9
    # K stays narrow (full-array last dim, NOT padded to 128): legal per the
    # "divisible by 128 OR full dim" rule, ~4x less HBM read for the stem.
    k_pad = round_up(k_raw, 8)

    chunk = _pick_hw_chunk(hw)
    hw_pad = round_up(hw, chunk)

    frames = x.reshape(n, c, h, w)
    patches = im2col_3x3(frames)                                  # (N,HW,C*9)
    patches = jnp.pad(patches, ((0, 0), (0, hw_pad - hw), (0, k_pad - k_raw)))
    patches = patches.astype(jnp.bfloat16)

    w_mat = conv_w.reshape(feat, k_raw).T                         # (C*9, F)
    w_mat = jnp.pad(w_mat, ((0, k_pad - k_raw), (0, 0))).astype(jnp.bfloat16)
    bias_row = conv_b[None, :].astype(jnp.float32)

    feats = cnn_forward(patches, w_mat, bias_row, n, hw, chunk)   # (N, F) f32

    # Per-slab time-major features: (nb, S*SLAB, F), rows ordered [t, b_in_slab].
    bp = round_up(b, SLAB)
    nb = bp // SLAB
    feats_bt = feats.reshape(b, s, feat)
    feats_bt = jnp.pad(feats_bt, ((0, bp - b), (0, 0), (0, 0)))
    feats_tm = (feats_bt.reshape(nb, SLAB, s, feat)
                .transpose(0, 2, 1, 3)
                .reshape(nb, s * SLAB, feat)
                .astype(jnp.bfloat16))

    hp = round_up(hidden, 128)
    outp = 128
    packed = pack_lstm_fc_params(lstm_params, fc_w1, fc_b1, fc_w2, fc_b2,
                                 hidden, hp, outp)
    out_pad = lstm_fc_forward(feats_tm, packed, s, nb, hp, outp, num_layers)
    return out_pad[:b, :7]


def reference_forward(x, conv_w, conv_b, lstm_params, fc_w1, fc_b1, fc_w2,
                      fc_b2, hidden, num_layers):
    b, s, c, h, w = x.shape
    frames = x.reshape(b * s, c, h, w)
    patches = im2col_3x3(frames)                                  # (N,HW,C*9)
    w_mat = conv_w.reshape(conv_w.shape[0], c * 9).T
    act = jnp.maximum(jnp.einsum('npk,kf->npf', patches, w_mat)
                      + conv_b[None, None, :], 0.0)
    feats = act.mean(axis=1).reshape(b, s, -1)

    hs = [jnp.zeros((b, hidden), jnp.float32) for _ in range(num_layers)]
    cs = [jnp.zeros((b, hidden), jnp.float32) for _ in range(num_layers)]
    x_t = None
    for t in range(s):
        x_t = feats[:, t, :]
        for l in range(num_layers):
            w_ih, w_hh, bias = lstm_params[l]
            z = x_t @ w_ih + hs[l] @ w_hh + bias
            i = jax.nn.sigmoid(z[:, 0 * hidden:1 * hidden])
            f = jax.nn.sigmoid(z[:, 1 * hidden:2 * hidden])
            g = jnp.tanh(z[:, 2 * hidden:3 * hidden])
            o = jax.nn.sigmoid(z[:, 3 * hidden:4 * hidden])
            cs[l] = f * cs[l] + i * g
            hs[l] = o * jnp.tanh(cs[l])
            x_t = hs[l]
    hfc = jnp.maximum(x_t @ fc_w1 + fc_b1, 0.0)
    return hfc @ fc_w2 + fc_b2


if __name__ == "__main__":
    B, S, C, H, W = 2, 4, 3, 16, 16
    FEAT = 128        # stand-in for resnet_output (512 in the real model)
    HIDDEN = 32
    NUM_LAYERS = 2

    keys = jax.random.split(jax.random.PRNGKey(0), 16)
    x = jax.random.normal(keys[0], (B, S, C, H, W), jnp.float32)

    conv_w = jax.random.normal(keys[1], (FEAT, C, 3, 3), jnp.float32) * 0.05
    conv_b = jax.random.normal(keys[2], (FEAT,), jnp.float32) * 0.05

    lstm_params = []
    in_dim = FEAT
    k = 3
    for _ in range(NUM_LAYERS):
        w_ih = jax.random.normal(keys[k], (in_dim, 4 * HIDDEN), jnp.float32) * 0.1
        w_hh = jax.random.normal(keys[k + 1], (HIDDEN, 4 * HIDDEN), jnp.float32) * 0.1
        bias = jax.random.normal(keys[k + 2], (1, 4 * HIDDEN), jnp.float32) * 0.1
        lstm_params.append((w_ih, w_hh, bias))   # bias = b_ih + b_hh, combined
        in_dim = HIDDEN
        k += 3

    fc_w1 = jax.random.normal(keys[k], (HIDDEN, HIDDEN), jnp.float32) * 0.1
    fc_b1 = jax.random.normal(keys[k + 1], (1, HIDDEN), jnp.float32) * 0.1
    fc_w2 = jax.random.normal(keys[k + 2], (HIDDEN, 7), jnp.float32) * 0.1
    fc_b2 = jax.random.normal(keys[k + 3], (1, 7), jnp.float32) * 0.1

    out = model_forward(x, conv_w, conv_b, lstm_params, fc_w1, fc_b1,
                        fc_w2, fc_b2, HIDDEN, NUM_LAYERS)
    out = jax.block_until_ready(out)

    ref = reference_forward(x, conv_w, conv_b, lstm_params, fc_w1, fc_b1,
                            fc_w2, fc_b2, HIDDEN, NUM_LAYERS)
    ref = jax.block_until_ready(ref)

    assert out.shape == (B, 7), out.shape
    assert jnp.all(jnp.isfinite(out))
    assert jnp.allclose(out, ref, atol=5e-2, rtol=5e-2)
    print("KERNEL_OK")
</pallas_src>

<mosaic_0001>
module attributes {stable_mosaic.version = 11 : i64} {
  func.func @cnn_kernel(%arg0: i32, %arg1: i32, %arg2: memref<1x256x32xbf16, #tpu.memory_space<vmem>>, %arg3: memref<32x128xbf16, #tpu.memory_space<vmem>>, %arg4: memref<1x128xf32, #tpu.memory_space<vmem>>, %arg5: memref<1x1x128xf32, #tpu.memory_space<vmem>>, %arg6: memref<1x128xf32, #tpu.memory_space<vmem>>) attributes {dimension_semantics = [#tpu.dimension_semantics<parallel>, #tpu.dimension_semantics<arbitrary>], iteration_bounds = array<i64: 8, 1>, scalar_prefetch = 0 : i64, scratch_operands = 1 : i64, tpu.core_type = #tpu.core_type<tc>, window_params = [{transform_indices = @transform_0, window_bounds = array<i64: 1, 256, 32>}, {pipeline_mode = #tpu.pipeline_mode<synchronous>, transform_indices = @transform_1, window_bounds = array<i64: 32, 128>}, {pipeline_mode = #tpu.pipeline_mode<synchronous>, transform_indices = @transform_2, window_bounds = array<i64: 1, 128>}, {transform_indices = @transform_3, window_bounds = array<i64: 1, 1, 128>}]} {
    %c0_i32 = arith.constant 0 : i32
    %0 = arith.cmpi eq, %arg1, %c0_i32 : i32
    %1 = arith.extui %0 : i1 to i32
    %c0_i32_0 = arith.constant 0 : i32
    %2 = arith.cmpi ne, %1, %c0_i32_0 : i32
    scf.if %2 {
      %cst_15 = arith.constant 0.000000e+00 : f32
      %20 = vector.broadcast %cst_15 : f32 to vector<1x128xf32>
      %c0_16 = arith.constant 0 : index
      %c0_17 = arith.constant 0 : index
      %21 = vector.load %arg6[%c0_16, %c0_17] : memref<1x128xf32, #tpu.memory_space<vmem>>, vector<1x128xf32>
      tpu.vector_store %arg6[%c0_16, %c0_17], %20 {strides = array<i32>} : memref<1x128xf32, #tpu.memory_space<vmem>>, vector<1x128xf32>,
    } else {
    }
    %c0 = arith.constant 0 : index
    %c0_1 = arith.constant 0 : index
    %c0_2 = arith.constant 0 : index
    %3 = vector.load %arg2[%c0, %c0_1, %c0_2] : memref<1x256x32xbf16, #tpu.memory_space<vmem>>, vector<1x256x32xbf16>
    %4 = vector.shape_cast %3 : vector<1x256x32xbf16> to vector<256x32xbf16>
    %c0_3 = arith.constant 0 : index
    %c0_4 = arith.constant 0 : index
    %5 = vector.load %arg3[%c0_3, %c0_4] : memref<32x128xbf16, #tpu.memory_space<vmem>>, vector<32x128xbf16>
    %cst = arith.constant dense<0.000000e+00> : vector<256x128xf32>
    %6 = tpu.matmul %4, %5, %cst {dimension_numbers = #tpu.dot_dimension_numbers<[1], [0], [0], [1], [0, 0, 1, 1], [], []>} : vector<256x32xbf16>, vector<32x128xbf16>, vector<256x128xf32> -> vector<256x128xf32>
    %c0_5 = arith.constant 0 : index
    %c0_6 = arith.constant 0 : index
    %7 = vector.load %arg4[%c0_5, %c0_6] : memref<1x128xf32, #tpu.memory_space<vmem>>, vector<1x128xf32>
    %8 = vector.broadcast %7 : vector<1x128xf32> to vector<256x128xf32>
    %9 = arith.addf %6, %8 : vector<256x128xf32>
    %cst_7 = arith.constant 0.000000e+00 : f32
    %10 = vector.broadcast %cst_7 : f32 to vector<256x128xf32>
    %11 = arith.maximumf %9, %10 : vector<256x128xf32>
    %c0_8 = arith.constant 0 : index
    %c0_9 = arith.constant 0 : index
    %12 = vector.load %arg6[%c0_8, %c0_9] : memref<1x128xf32, #tpu.memory_space<vmem>>, vector<1x128xf32>
    %cst_10 = arith.constant dense<0.000000e+00> : vector<128xf32>
    %13 = vector.multi_reduction <add>, %11, %cst_10 [0] : vector<256x128xf32> to vector<128xf32>
    %14 = vector.shape_cast %13 : vector<128xf32> to vector<1x128xf32>
    %15 = arith.addf %12, %14 : vector<1x128xf32>
    %c0_11 = arith.constant 0 : index
    %c0_12 = arith.constant 0 : index
    %16 = vector.load %arg6[%c0_11, %c0_12] : memref<1x128xf32, #tpu.memory_space<vmem>>, vector<1x128xf32>
    tpu.vector_store %arg6[%c0_11, %c0_12], %15 {strides = array<i32>} : memref<1x128xf32, #tpu.memory_space<vmem>>, vector<1x128xf32>,
    %c0_i32_13 = arith.constant 0 : i32
    %17 = arith.cmpi eq, %arg1, %c0_i32_13 : i32
    %18 = arith.extui %17 : i1 to i32
    %c0_i32_14 = arith.constant 0 : i32
    %19 = arith.cmpi ne, %18, %c0_i32_14 : i32
    scf.if %19 {
      %c0_15 = arith.constant 0 : index
      %c0_16 = arith.constant 0 : index
      %20 = vector.load %arg6[%c0_15, %c0_16] : memref<1x128xf32, #tpu.memory_space<vmem>>, vector<1x128xf32>
      %cst_17 = arith.constant 3.906250e-03 : f32
      %21 = vector.broadcast %cst_17 : f32 to vector<1x128xf32>
      %22 = arith.mulf %20, %21 : vector<1x128xf32>
      %c0_18 = arith.constant 0 : index
      %c0_19 = arith.constant 0 : index
      %c0_20 = arith.constant 0 : index
      %23 = vector.load %arg5[%c0_18, %c0_19, %c0_20] : memref<1x1x128xf32, #tpu.memory_space<vmem>>, vector<1x1x128xf32>
      %24 = vector.shape_cast %23 : vector<1x1x128xf32> to vector<1x128xf32>
      %25 = vector.shape_cast %22 : vector<1x128xf32> to vector<1x1x128xf32>
      tpu.vector_store %arg5[%c0_18, %c0_19, %c0_20], %25 {strides = array<i32>} : memref<1x1x128xf32, #tpu.memory_space<vmem>>, vector<1x1x128xf32>,
    } else {
    }
    return
  }
  func.func @transform_0(%arg0: i32, %arg1: i32) -> (i32, i32, i32) {
    %c0_i32 = arith.constant 0 : i32
    %c0_i32_0 = arith.constant 0 : i32
    return %arg0, %arg1, %c0_i32 : i32, i32, i32
  }
  func.func @transform_1(%arg0: i32, %arg1: i32) -> (i32, i32) {
    %c0_i32 = arith.constant 0 : i32
    %c0_i32_0 = arith.constant 0 : i32
    %c0_i32_1 = arith.constant 0 : i32
    return %c0_i32, %c0_i32_0 : i32, i32
  }
  func.func @transform_2(%arg0: i32, %arg1: i32) -> (i32, i32) {
    %c0_i32 = arith.constant 0 : i32
    %c0_i32_0 = arith.constant 0 : i32
    %c0_i32_1 = arith.constant 0 : i32
    return %c0_i32, %c0_i32_0 : i32, i32
  }
  func.func @transform_3(%arg0: i32, %arg1: i32) -> (i32, i32, i32) {
    %c0_i32 = arith.constant 0 : i32
    %c0_i32_0 = arith.constant 0 : i32
    %c0_i32_1 = arith.constant 0 : i32
    return %arg0, %c0_i32, %c0_i32_0 : i32, i32, i32
  }
}

</mosaic_0001>

<llo_original>
// kernel: tpu_custom_call.1
$region0: #{tpu_custom_call.1}
  #allocation0 [shape = 'u32[]', space=smem, size = 0x4, offset = 0x4, fixed_abs, tag = 'smem constant byte address 0x4 - core index']
  #allocation1 [shape = 'u32[72,128]{1,0:T(1,128)}', space=vmem, size = 0x9000, scoped, tag = 'internal scratch']
  #allocation2 [shape = 'f32[1,128]{1,0:T(1,128)}', space=vmem, size = 0x200, scoped, tag = 'scratch operand']
  %s0 = inlined_call_operand.vmem [shape: bf16[8,256,32], index: 0, kind: input, shape index: {}]
  %s1 = inlined_call_operand.vmem [shape: bf16[32,128], index: 1, kind: input, shape index: {}]
  %s2 = inlined_call_operand.vmem [shape: f32[1,128], index: 2, kind: input, shape index: {}]
  %s3 = inlined_call_operand.hbm [shape: f32[8,1,128], index: 3, kind: output, shape index: {}]
  %s4 = sld [smem:[#allocation0]]
  $region53: #{tpu_custom_call.1} parent=0
    _
  %s6 = ssub.s32 1, %s4
  %s7 = scalar_select 0, %s6, %s4
  $region1: #{tpu_custom_call.1} parent=0
    #allocation3 [shape = 'u8[1024]{0}', space=vmem, size = 0x400, scoped, tag = 'output window, operand 0']
    #allocation4 [shape = 's32[2]{0}', space=sflag, size = 0x8, scoped, tag = 'scoped memory for tpu_custom_call.1']
    %8 = vsyncpa [#allocation4], 0
    %s9 = scalar_lea.sflag [#allocation4], 1
    %10 = vsyncpa %s9, 0
    loop: start=0, step=1, limit=10
    $region2: #{tpu_custom_call.1} parent=1 // loop_pre_header
      _
    $region3: #{tpu_custom_call.1} parent=1 // loop_header
      %s12 = sphi 0, %s16
      %p13 = scmp.ge.s32.totalorder %s12, 10
      %s19 = sphi 0, %s31
      %s20 = sphi 0, %s27
      %s21 = sphi 0, %s19
      %s22 = sphi 0, %s20
      %s23 = sphi 0, %s21
      %s24 = sphi 0, %s22
      %s36 = sphi 0, %s38
      %s39 = sphi 0, %s36
      %s40 = sphi 0, %s39
      %s56 = sphi 0, %s40
      %s60 = sphi 0, %s60
      %s62 = sphi 0, %s60
      %s63 = sphi 0, %s62
      %s77 = sphi 0, %s63
      %s81 = sphi 0, %s81
      %s83 = sphi 0, %s81
      %s84 = sphi 0, %s83
      %s98 = sphi 0, %s84
      %s104 = sphi 0, %s106
      %s107 = sphi 0, %s104
      %s108 = sphi 0, %s107
      %s124 = sphi 0, %s108
    $region4: #{tpu_custom_call.1} parent=1 // loop_header_branch
      %15 = sbr.rel (%p13) target = $region8
    $region5: #{tpu_custom_call.1} parent=1 // loop_body
      %s17 = ssub.s32 %s12, 1
      %s18 = ssub.s32 %s12, 2
      %s25 = sadd.s32 1, %s20
      %p26 = scmp.ge.s32.totalorder %s25, 1
      %s27 = scalar_select %p26, 0, %s25
      %s28 = sadd.s32 1, %s19
      %s29 = scalar_select %p26, %s28, %s19
      %p30 = scmp.ge.s32.totalorder %s29, 8
      %s31 = scalar_select %p30, 0, %s29
      %s32 = ssub.s32 %s19, %s31
      %s33 = ssub.s32 %s20, %s27
      %s34 = sor.u32 %s32, %s33
      %p35 = scmp.eq.s32.totalorder %s34, 0
      %s37 = sadd.s32 %s36, 1
      %s38 = scalar_select %p35, %s36, %s37
      %p41 = pneg %p35
      %p42 = scmp.eq.s32.totalorder %s12, 7
      %p43 = por %p41, %p42
      %p44 = scmp.ne.s32.totalorder %s36, %s39
      %p45 = scmp.eq.s32.totalorder %s12, 0
      %p46 = por %p44, %p45
      %p47 = scmp.ne.s32.totalorder %s36, %s39
      %p48 = scmp.eq.s32.totalorder %s17, 7
      %p49 = por %p47, %p48
      %p50 = scmp.ne.s32.totalorder %s39, %s40
      %p51 = scmp.eq.s32.totalorder %s17, 0
      %p52 = por %p50, %p51
      %p53 = scmp.ne.s32.totalorder %s39, %s40
      %p54 = scmp.eq.s32.totalorder %s18, 7
      %p55 = por %p53, %p54
      %p57 = scmp.ne.s32.totalorder %s40, %s56
      %p58 = scmp.eq.s32.totalorder %s18, 0
      %p59 = por %p57, %p58
      %s61 = sadd.s32 %s60, 1
      %p64 = scmp.eq.s32.totalorder %s12, 7
      %p65 = scmp.ne.s32.totalorder %s60, %s62
      %p66 = scmp.eq.s32.totalorder %s12, 0
      %p67 = por %p65, %p66
      %p68 = scmp.ne.s32.totalorder %s60, %s62
      %p69 = scmp.eq.s32.totalorder %s17, 7
      %p70 = por %p68, %p69
      %p71 = scmp.ne.s32.totalorder %s62, %s63
      %p72 = scmp.eq.s32.totalorder %s17, 0
      %p73 = por %p71, %p72
      %p74 = scmp.ne.s32.totalorder %s62, %s63
      %p75 = scmp.eq.s32.totalorder %s18, 7
      %p76 = por %p74, %p75
      %p78 = scmp.ne.s32.totalorder %s63, %s77
      %p79 = scmp.eq.s32.totalorder %s18, 0
      %p80 = por %p78, %p79
      %s82 = sadd.s32 %s81, 1
      %p85 = scmp.eq.s32.totalorder %s12, 7
      %p86 = scmp.ne.s32.totalorder %s81, %s83
      %p87 = scmp.eq.s32.totalorder %s12, 0
      %p88 = por %p86, %p87
      %p89 = scmp.ne.s32.totalorder %s81, %s83
      %p90 = scmp.eq.s32.totalorder %s17, 7
      %p91 = por %p89, %p90
      %p92 = scmp.ne.s32.totalorder %s83, %s84
      %p93 = scmp.eq.s32.totalorder %s17, 0
      %p94 = por %p92, %p93
      %p95 = scmp.ne.s32.totalorder %s83, %s84
      %p96 = scmp.eq.s32.totalorder %s18, 7
      %p97 = por %p95, %p96
      %p99 = scmp.ne.s32.totalorder %s84, %s98
      %p100 = scmp.eq.s32.totalorder %s18, 0
      %p101 = por %p99, %p100
      %s102 = ssub.s32 %s19, %s31
      %p103 = scmp.eq.s32.totalorder %s102, 0
      %s105 = sadd.s32 %s104, 1
      %s106 = scalar_select %p103, %s104, %s105
      %p109 = pneg %p103
      %p110 = scmp.eq.s32.totalorder %s12, 7
      %p111 = por %p109, %p110
      %p112 = scmp.ne.s32.totalorder %s104, %s107
      %p113 = scmp.eq.s32.totalorder %s12, 0
      %p114 = por %p112, %p113
      %p115 = scmp.ne.s32.totalorder %s104, %s107
      %p116 = scmp.eq.s32.totalorder %s17, 7
      %p117 = por %p115, %p116
      %p118 = scmp.ne.s32.totalorder %s107, %s108
      %p119 = scmp.eq.s32.totalorder %s17, 0
      %p120 = por %p118, %p119
      %p121 = scmp.ne.s32.totalorder %s107, %s108
      %p122 = scmp.eq.s32.totalorder %s18, 7
      %p123 = por %p121, %p122
      %p125 = scmp.ne.s32.totalorder %s108, %s124
      %p126 = scmp.eq.s32.totalorder %s18, 0
      %p127 = por %p125, %p126
      %p128 = scmp.le.s32.totalorder 1, %s12
      %p129 = scmp.lt.s32.totalorder %s12, 9
      %p130 = pnand %p128, %p129
      %p131 = pneg %p130
      // Predicated region
      $region9: #{tpu_custom_call.1} parent=5 // pred_check
        _
      $region10: #{tpu_custom_call.1} parent=5 // pred_check_branch
        %133 = sbr.rel (%p130) target = $region12
      $region11: #{tpu_custom_call.1} parent=5 // pred_region
        %s134 = ssub.s32 %s12, 1
        // Predicated region
        $region13: #{tpu_custom_call.1} parent=11 // pred_check
          %p135 = pneg %p73
        $region14: #{tpu_custom_call.1} parent=11 // pred_check_branch
          %137 = sbr.rel (%p135) target = $region16
        $region15: #{tpu_custom_call.1} parent=11 // pred_region
          _
        $region16: #{tpu_custom_call.1} parent=11 // pred_fallthru
          _
        // Predicated region
        $region17: #{tpu_custom_call.1} parent=11 // pred_check
          %p138 = pneg %p94
        $region18: #{tpu_custom_call.1} parent=11 // pred_check_branch
          %140 = sbr.rel (%p138) target = $region20
        $region19: #{tpu_custom_call.1} parent=11 // pred_region
          _
        $region20: #{tpu_custom_call.1} parent=11 // pred_fallthru
          _
      $region12: #{tpu_custom_call.1} parent=5 // pred_fallthru
        _
      %p141 = scmp.lt.s32.totalorder %s12, 8
      // Predicated region
      $region21: #{tpu_custom_call.1} parent=5 // pred_check
        %p142 = pneg %p141
      $region22: #{tpu_custom_call.1} parent=5 // pred_check_branch
        %144 = sbr.rel (%p142) target = $region24
      $region23: #{tpu_custom_call.1} parent=5 // pred_region
        // Predicated region
        $region25: #{tpu_custom_call.1} parent=23 // pred_check
          %p145 = pneg %p46
        $region26: #{tpu_custom_call.1} parent=23 // pred_check_branch
          %147 = sbr.rel (%p145) target = $region28
        $region27: #{tpu_custom_call.1} parent=23 // pred_region
          %s148 = smul.u32 32, %s20
          %p149 = scmp.lt.s32.totalorder %s19, 7
          %s150 = scalar_select %p149, %s19, 7
          %p151 = scmp.lt.s32.totalorder %s148, 31
          %s152 = scalar_select %p151, %s148, 31
          %s153 = smul.addr %s150, 32
          %s154 = sadd.s32 %s152, %s153
          %s155 = smul.addr %s154, 4
          %s156 = scalar_lea.vmem %s0, %s155
          %s157 = smul.u32 32, %s20
        $region28: #{tpu_custom_call.1} parent=23 // pred_fallthru
          _
      $region24: #{tpu_custom_call.1} parent=5 // pred_fallthru
        _
      %p158 = scmp.le.s32.totalorder 1, %s12
      %p159 = scmp.lt.s32.totalorder %s12, 9
      %p160 = pnand %p158, %p159
      %p161 = pneg %p160
      // Predicated region
      $region29: #{tpu_custom_call.1} parent=5 // pred_check
        _
      $region30: #{tpu_custom_call.1} parent=5 // pred_check_branch
        %163 = sbr.rel (%p160) target = $region32
      $region31: #{tpu_custom_call.1} parent=5 // pred_region
        %s164 = ssub.s32 %s12, 1
        %s165 = smul.u32 32, %s22
        %p166 = scmp.lt.s32.totalorder %s21, 7
        %s167 = scalar_select %p166, %s21, 7
        %p168 = scmp.lt.s32.totalorder %s165, 31
        %s169 = scalar_select %p168, %s165, 31
        %s170 = smul.addr %s167, 32
        %s171 = sadd.s32 %s169, %s170
        %s172 = smul.addr %s171, 4
        %s173 = scalar_lea.vmem %s0, %s172
        %p174 = pneg %p52
        %p175 = pneg %p49
        %p176 = pneg %p73
        %p177 = pneg %p70
        %p178 = pneg %p94
        %p179 = pneg %p91
        %p180 = pneg %p120
        %p181 = pneg %p117
        %s182 = sand.u32 %s107, 1
        %s183 = scalar_lea.sflag [#allocation4], %s182
        %s184 = sand.u32 %s107, 1
        %s185 = scalar_lea.vmem [#allocation3], %s184
        %s186 = smul.u32 32, %s22
        %p187 = scmp.lt.s32.totalorder %s21, 7
        %s188 = scalar_select %p187, %s21, 7
        %p189 = scmp.lt.s32.totalorder %s186, 31
        %s190 = scalar_select %p189, %s186, 31
        %s191 = smul.addr %s188, 32
        %s192 = sadd.s32 %s190, %s191
        %s193 = smul.addr %s192, 4
        %s194 = scalar_lea.vmem %s0, %s193
        %s195 = smul.u32 32, %s22
        %p197 = scmp.eq.s32.totalorder %s22, 0
        // Predicated region
        $region33: #{tpu_custom_call.1} parent=31 // pred_check
          %p198 = pneg %p197
        $region34: #{tpu_custom_call.1} parent=31 // pred_check_branch
          %200 = sbr.rel (%p198) target = $region36
        $region35: #{tpu_custom_call.1} parent=31 // pred_region
          %201 = vst [vmem:[#allocation2] sm:$0x1] 0.0
        $region36: #{tpu_custom_call.1} parent=31 // pred_fallthru
          _
        %v202 = vld [vmem:[%s194] sm:$0xf]
        %v203 = vld [vmem:[%s194 + $0x4] sm:$0xf]
        %v204 = vld [vmem:[%s194 + $0x8] sm:$0xf]
        %v205 = vld [vmem:[%s194 + $0xc] sm:$0xf]
        %v206 = vld [vmem:[%s194 + $0x10] sm:$0xf]
        %v207 = vld [vmem:[%s194 + $0x14] sm:$0xf]
        %v208 = vld [vmem:[%s194 + $0x18] sm:$0xf]
        %v209 = vld [vmem:[%s194 + $0x1c] sm:$0xf]
        %v210 = vld [vmem:[%s194 + $0x20] sm:$0xf]
        %v211 = vld [vmem:[%s194 + $0x24] sm:$0xf]
        %v212 = vld [vmem:[%s194 + $0x28] sm:$0xf]
        %v213 = vld [vmem:[%s194 + $0x2c] sm:$0xf]
        %v214 = vld [vmem:[%s194 + $0x30] sm:$0xf]
        %v215 = vld [vmem:[%s194 + $0x34] sm:$0xf]
        %v216 = vld [vmem:[%s194 + $0x38] sm:$0xf]
        %v217 = vld [vmem:[%s194 + $0x3c] sm:$0xf]
        %v218 = vld [vmem:[%s194 + $0x40] sm:$0xf]
        %v219 = vld [vmem:[%s194 + $0x44] sm:$0xf]
        %v220 = vld [vmem:[%s194 + $0x48] sm:$0xf]
        %v221 = vld [vmem:[%s194 + $0x4c] sm:$0xf]
        %v222 = vld [vmem:[%s194 + $0x50] sm:$0xf]
        %v223 = vld [vmem:[%s194 + $0x54] sm:$0xf]
        %v224 = vld [vmem:[%s194 + $0x58] sm:$0xf]
        %v225 = vld [vmem:[%s194 + $0x5c] sm:$0xf]
        %v226 = vld [vmem:[%s194 + $0x60] sm:$0xf]
        %v227 = vld [vmem:[%s194 + $0x64] sm:$0xf]
        %v228 = vld [vmem:[%s194 + $0x68] sm:$0xf]
        %v229 = vld [vmem:[%s194 + $0x6c] sm:$0xf]
        %v230 = vld [vmem:[%s194 + $0x70] sm:$0xf]
        %v231 = vld [vmem:[%s194 + $0x74] sm:$0xf]
        %v232 = vld [vmem:[%s194 + $0x78] sm:$0xf]
        %v233 = vld [vmem:[%s194 + $0x7c] sm:$0xf]
        %v234 = vld [vmem:[%s1] sm:$0xf]
        %v235 = vld [vmem:[%s1 + $0x4] sm:$0xf]
        %v236 = vld [vmem:[%s1 + $0x8] sm:$0xf]
        %v237 = vld [vmem:[%s1 + $0xc] sm:$0xf]
        %v238 = vld [vmem:[%s2] sm:$0x1]
        %v240 = vperm.slane %v238, 0
        %v274 = vunpack.c.l.b16 %v202
        %v275 = vunpack.c.l.b16 %v203
        %v276 = vunpack.c.l.b16 %v204
        %v277 = vunpack.c.l.b16 %v205
        %v278 = vunpack.c.l.b16 %v206
        %v279 = vunpack.c.l.b16 %v207
        %v280 = vunpack.c.l.b16 %v208
        %v281 = vunpack.c.l.b16 %v209
        %v282 = vunpack.c.l.b16 %v210
        %v283 = vunpack.c.l.b16 %v211
        %v284 = vunpack.c.l.b16 %v212
        %v285 = vunpack.c.l.b16 %v213
        %v286 = vunpack.c.l.b16 %v214
        %v287 = vunpack.c.l.b16 %v215
        %v288 = vunpack.c.l.b16 %v216
        %v289 = vunpack.c.l.b16 %v217
        %v290 = vunpack.c.l.b16 %v218
        %v291 = vunpack.c.l.b16 %v219
        %v292 = vunpack.c.l.b16 %v220
        %v293 = vunpack.c.l.b16 %v221
        %v294 = vunpack.c.l.b16 %v222
        %v295 = vunpack.c.l.b16 %v223
        %v296 = vunpack.c.l.b16 %v224
        %v297 = vunpack.c.l.b16 %v225
        %v298 = vunpack.c.l.b16 %v226
        %v299 = vunpack.c.l.b16 %v227
        %v300 = vunpack.c.l.b16 %v228
        %v301 = vunpack.c.l.b16 %v229
        %v302 = vunpack.c.l.b16 %v230
        %v303 = vunpack.c.l.b16 %v231
        %v304 = vunpack.c.l.b16 %v232
        %v305 = vunpack.c.l.b16 %v233
        %v306 = vpack.c.b16 %v275, %v274
        %v307 = vpack.c.b16 %v277, %v276
        %v308 = vpack.c.b16 %v279, %v278
        %v309 = vpack.c.b16 %v281, %v280
        %v310 = vpack.c.b16 %v283, %v282
        %v311 = vpack.c.b16 %v285, %v284
        %v312 = vpack.c.b16 %v287, %v286
        %v313 = vpack.c.b16 %v289, %v288
        %v314 = vpack.c.b16 %v291, %v290
        %v315 = vpack.c.b16 %v293, %v292
        %v316 = vpack.c.b16 %v295, %v294
        %v317 = vpack.c.b16 %v297, %v296
        %v318 = vpack.c.b16 %v299, %v298
        %v319 = vpack.c.b16 %v301, %v300
        %v320 = vpack.c.b16 %v303, %v302
        %v321 = vpack.c.b16 %v305, %v304
        %v326 = vunpack.c.l.b16 %v234
        %v327 = vunpack.c.l.b16 %v235
        %v328 = vunpack.c.l.b16 %v236
        %v329 = vunpack.c.l.b16 %v237
        %v330 = vpack.c.b16 %v327, %v326
        %v331 = vpack.c.b16 %v329, %v328
        %vm334 = vcmask 261120
        %v336 = vsel %vm334, %v306, 0
        %v339 = vsel %vm334, %v307, 0
        %v342 = vsel %vm334, %v308, 0
        %v345 = vsel %vm334, %v309, 0
        %v348 = vsel %vm334, %v310, 0
        %v351 = vsel %vm334, %v311, 0
        %v354 = vsel %vm334, %v312, 0
        %v357 = vsel %vm334, %v313, 0
        %v360 = vsel %vm334, %v314, 0
        %v363 = vsel %vm334, %v315, 0
        %v366 = vsel %vm334, %v316, 0
        %v369 = vsel %vm334, %v317, 0
        %v372 = vsel %vm334, %v318, 0
        %v375 = vsel %vm334, %v319, 0
        %v378 = vsel %vm334, %v320, 0
        %v381 = vsel %vm334, %v321, 0
        %383 = vmatpush.bf16.msra.mxu0 0
        %384 = vmatpush.bf16.msra.mxu0 0
        %385 = vmatpush.bf16.msra.mxu0 0
        %386 = vmatpush.bf16.msra.mxu0 0
        %387 = vmatpush.bf16.msra.mxu0 0
        %388 = vmatpush.bf16.msra.mxu0 0
        %389 = vmatpush.bf16.msra.mxu0 %v331
        %390 = vmatpush.bf16.msra.mxu0 %v330
        %391 = vmatmul.bf16.gmra.mxu0 %v336
        %v392 = vpop.f32.mrf.mxu0
        %v393 = vadd.f32 %v240, %v392
        %v394 = vpop.f32.mrf.mxu0
        %v395 = vadd.f32 %v240, %v394
        %396 = vmatmul.bf16.gmra.mxu0 %v339
        %v397 = vpop.f32.mrf.mxu0
        %v398 = vadd.f32 %v240, %v397
        %v399 = vpop.f32.mrf.mxu0
        %v400 = vadd.f32 %v240, %v399
        %401 = vmatmul.bf16.gmra.mxu0 %v342
        %v402 = vpop.f32.mrf.mxu0
        %v403 = vadd.f32 %v240, %v402
        %v404 = vpop.f32.mrf.mxu0
        %v405 = vadd.f32 %v240, %v404
        %406 = vmatmul.bf16.gmra.mxu0 %v345
        %v407 = vpop.f32.mrf.mxu0
        %v408 = vadd.f32 %v240, %v407
        %v409 = vpop.f32.mrf.mxu0
        %v410 = vadd.f32 %v240, %v409
        %411 = vmatmul.bf16.gmra.mxu0 %v348
        %v412 = vpop.f32.mrf.mxu0
        %v413 = vadd.f32 %v240, %v412
        %v414 = vpop.f32.mrf.mxu0
        %v415 = vadd.f32 %v240, %v414
        %416 = vmatmul.bf16.gmra.mxu0 %v351
        %v417 = vpop.f32.mrf.mxu0
        %v418 = vadd.f32 %v240, %v417
        %v419 = vpop.f32.mrf.mxu0
        %v420 = vadd.f32 %v240, %v419
        %421 = vmatmul.bf16.gmra.mxu0 %v354
        %v422 = vpop.f32.mrf.mxu0
        %v423 = vadd.f32 %v240, %v422
        %v424 = vpop.f32.mrf.mxu0
        %v425 = vadd.f32 %v240, %v424
        %426 = vmatmul.bf16.gmra.mxu0 %v357
        %v427 = vpop.f32.mrf.mxu0
        %v428 = vadd.f32 %v240, %v427
        %v429 = vpop.f32.mrf.mxu0
        %v430 = vadd.f32 %v240, %v429
        %431 = vmatmul.bf16.gmra.mxu0 %v360
        %v432 = vpop.f32.mrf.mxu0
        %v433 = vadd.f32 %v240, %v432
        %v434 = vpop.f32.mrf.mxu0
        %v435 = vadd.f32 %v240, %v434
        %436 = vmatmul.bf16.gmra.mxu0 %v363
        %v437 = vpop.f32.mrf.mxu0
        %v438 = vadd.f32 %v240, %v437
        %v439 = vpop.f32.mrf.mxu0
        %v440 = vadd.f32 %v240, %v439
        %441 = vmatmul.bf16.gmra.mxu0 %v366
        %v442 = vpop.f32.mrf.mxu0
        %v443 = vadd.f32 %v240, %v442
        %v444 = vpop.f32.mrf.mxu0
        %v445 = vadd.f32 %v240, %v444
        %446 = vmatmul.bf16.gmra.mxu0 %v369
        %v447 = vpop.f32.mrf.mxu0
        %v448 = vadd.f32 %v240, %v447
        %v449 = vpop.f32.mrf.mxu0
        %v450 = vadd.f32 %v240, %v449
        %451 = vmatmul.bf16.gmra.mxu0 %v372
        %v452 = vpop.f32.mrf.mxu0
        %v453 = vadd.f32 %v240, %v452
        %v454 = vpop.f32.mrf.mxu0
        %v455 = vadd.f32 %v240, %v454
        %456 = vmatmul.bf16.gmra.mxu0 %v375
        %v457 = vpop.f32.mrf.mxu0
        %v458 = vadd.f32 %v240, %v457
        %v459 = vpop.f32.mrf.mxu0
        %v460 = vadd.f32 %v240, %v459
        %461 = vmatmul.bf16.gmra.mxu0 %v378
        %v462 = vpop.f32.mrf.mxu0
        %v463 = vadd.f32 %v240, %v462
        %v464 = vpop.f32.mrf.mxu0
        %v465 = vadd.f32 %v240, %v464
        %466 = vmatmul.bf16.gmra.mxu0 %v381
        %v467 = vpop.f32.mrf.mxu0
        %v468 = vadd.f32 %v240, %v467
        %v469 = vpop.f32.mrf.mxu0
        %v470 = vadd.f32 %v240, %v469
        %471 = vdwg.mxu0
        %v472 = vmax.f32 %v393, 0.0
        %v473 = vmax.f32 %v395, 0.0
        %v474 = vmax.f32 %v398, 0.0
        %v475 = vmax.f32 %v400, 0.0
        %v476 = vmax.f32 %v403, 0.0
        %v477 = vmax.f32 %v405, 0.0
        %v478 = vmax.f32 %v408, 0.0
        %v479 = vmax.f32 %v410, 0.0
        %v480 = vmax.f32 %v413, 0.0
        %v481 = vmax.f32 %v415, 0.0
        %v482 = vmax.f32 %v418, 0.0
        %v483 = vmax.f32 %v420, 0.0
        %v484 = vmax.f32 %v423, 0.0
        %v485 = vmax.f32 %v425, 0.0
        %v486 = vmax.f32 %v428, 0.0
        %v487 = vmax.f32 %v430, 0.0
        %v488 = vmax.f32 %v433, 0.0
        %v489 = vmax.f32 %v435, 0.0
        %v490 = vmax.f32 %v438, 0.0
        %v491 = vmax.f32 %v440, 0.0
        %v492 = vmax.f32 %v443, 0.0
        %v493 = vmax.f32 %v445, 0.0
        %v494 = vmax.f32 %v448, 0.0
        %v495 = vmax.f32 %v450, 0.0
        %v496 = vmax.f32 %v453, 0.0
        %v497 = vmax.f32 %v455, 0.0
        %v498 = vmax.f32 %v458, 0.0
        %v499 = vmax.f32 %v460, 0.0
        %v500 = vmax.f32 %v463, 0.0
        %v501 = vmax.f32 %v465, 0.0
        %v502 = vmax.f32 %v468, 0.0
        %v503 = vmax.f32 %v470, 0.0
        %v504 = vld [vmem:[#allocation2] sm:$0x1]
        %v505 = vadd.f32 %v472, %v473
        %v506 = vadd.f32 %v505, %v474
        %v507 = vadd.f32 %v506, %v475
        %v508 = vadd.f32 %v507, %v476
        %v509 = vadd.f32 %v508, %v477
        %v510 = vadd.f32 %v509, %v478
        %v511 = vadd.f32 %v510, %v479
        %v512 = vadd.f32 %v511, %v480
        %v513 = vadd.f32 %v512, %v481
        %v514 = vadd.f32 %v513, %v482
        %v515 = vadd.f32 %v514, %v483
        %v516 = vadd.f32 %v515, %v484
        %v517 = vadd.f32 %v516, %v485
        %v518 = vadd.f32 %v517, %v486
        %v519 = vadd.f32 %v518, %v487
        %v520 = vadd.f32 %v519, %v488
        %v521 = vadd.f32 %v520, %v489
        %v522 = vadd.f32 %v521, %v490
        %v523 = vadd.f32 %v522, %v491
        %v524 = vadd.f32 %v523, %v492
        %v525 = vadd.f32 %v524, %v493
        %v526 = vadd.f32 %v525, %v494
        %v527 = vadd.f32 %v526, %v495
        %v528 = vadd.f32 %v527, %v496
        %v529 = vadd.f32 %v528, %v497
        %v530 = vadd.f32 %v529, %v498
        %v531 = vadd.f32 %v530, %v499
        %v532 = vadd.f32 %v531, %v500
        %v533 = vadd.f32 %v532, %v501
        %v534 = vadd.f32 %v533, %v502
        %v535 = vadd.f32 %v534, %v503
        %v536 = vrot.slane %v535, 4
        %v537 = vadd.f32 %v535, %v536
        %v538 = vrot.slane %v537, 2
        %v539 = vadd.f32 %v537, %v538
        %v540 = vrot.slane %v539, 1
        %v541 = vadd.f32 %v539, %v540
        %v542 = vadd.f32 %v504, %v541
        %543 = vst [vmem:[#allocation2] sm:$0x1] %v542
        // Predicated region
        $region37: #{tpu_custom_call.1} parent=31 // pred_check
          %p544 = pneg %p197
        $region38: #{tpu_custom_call.1} parent=31 // pred_check_branch
          %546 = sbr.rel (%p544) target = $region40
        $region39: #{tpu_custom_call.1} parent=31 // pred_region
          %v547 = vld [vmem:[#allocation2] sm:$0x1]
          %v548 = vmul.f32 %v547, 0.00390625
          %549 = vst [vmem:[%s185] sm:$0x1] %v548
        $region40: #{tpu_custom_call.1} parent=31 // pred_fallthru
          _
        %s550 = sand.u32 %s107, 1
        %s551 = scalar_lea.sflag [#allocation4], %s550
        %s552 = sand.u32 %s107, 1
        %s553 = scalar_lea.vmem [#allocation3], %s552
        // Predicated region
        $region41: #{tpu_custom_call.1} parent=31 // pred_check
          %p554 = pneg %p117
        $region42: #{tpu_custom_call.1} parent=31 // pred_check_branch
          %556 = sbr.rel (%p554) target = $region44
        $region43: #{tpu_custom_call.1} parent=31 // pred_region
          %558 = vsyncadd %s551, 0
          %s559 = scalar_lea.hbm %s3, %s21
          %s561 = sshll.u32 %s553, 4
          %s562 = int_to_ptr.vmem [resolvable:$true] %s561
          %s563 = sshll.u32 %s559, 4
          %s564 = int_to_ptr.hbm [resolvable:$true] %s563
          %566 = dma.vmem_to_hbm [thread:$0]  %s562, 16, %s564, %s551
        $region44: #{tpu_custom_call.1} parent=31 // pred_fallthru
          _
      $region32: #{tpu_custom_call.1} parent=5 // pred_fallthru
        _
      %p567 = scmp.le.s32.totalorder 2, %s12
      // Predicated region
      $region45: #{tpu_custom_call.1} parent=5 // pred_check
        %p568 = pneg %p567
      $region46: #{tpu_custom_call.1} parent=5 // pred_check_branch
        %570 = sbr.rel (%p568) target = $region48
      $region47: #{tpu_custom_call.1} parent=5 // pred_region
        %s571 = ssub.s32 %s12, 2
        // Predicated region
        $region49: #{tpu_custom_call.1} parent=47 // pred_check
          %p572 = pneg %p123
        $region50: #{tpu_custom_call.1} parent=47 // pred_check_branch
          %574 = sbr.rel (%p572) target = $region52
        $region51: #{tpu_custom_call.1} parent=47 // pred_region
          %s575 = sand.u32 %s108, 1
          %s576 = scalar_lea.sflag [#allocation4], %s575
          %s577 = sand.u32 %s108, 1
          %s578 = scalar_lea.vmem [#allocation3], %s577
          %580 = dma.done %s576, 16
        $region52: #{tpu_custom_call.1} parent=47 // pred_fallthru
          _
      $region48: #{tpu_custom_call.1} parent=5 // pred_fallthru
        _
    $region6: #{tpu_custom_call.1} parent=1 // loop_footer
      %s16 = sadd.s32 1, %s12
    $region7: #{tpu_custom_call.1} parent=1 // loop_footer_branch
      %11 = sbr.rel target = $region3
    $region8: #{tpu_custom_call.1} parent=1 // loop_exit
      _
    %581 = vsyncpa [#allocation4], 1
    %s582 = scalar_lea.sflag [#allocation4], 1
    %583 = vsyncpa %s582, 1

</llo_original>
